<compile_context>
chip_gen: v6e
topology: v6e:2x2x1
jax: 0.10.0
libtpu: 0.0.40
codegen_flags: <defaults>
</compile_context>

<pallas_src>
import jax
import jax.numpy as jnp
from jax.experimental import pallas as pl
from jax.experimental.pallas import tpu as pltpu


# ---------------------------------------------------------------------------
# Kernel body
# ---------------------------------------------------------------------------
def _mlp_kernel(x_ref, w1_ref, b1_ref, w2_ref, b2_ref, o_ref):
    TB, N, _ = x_ref.shape
    H = w1_ref.shape[1]

    # One MXU call over the whole batch tile: (TB*N, N) @ (N, H) -> f32 acc.
    x2 = x_ref[...].reshape(TB * N, N)
    h = jnp.dot(x2, w1_ref[...], preferred_element_type=jnp.float32)
    h = jnp.maximum(h + b1_ref[...], 0.0)                     # (TB*N, H) f32

    # Pool over the node axis BEFORE the second linear (exact: the affine layer
    # commutes with the mean).  1/N is folded into W2 in the wrapper, so a sum
    # suffices here.
    pooled = h.reshape(TB, N, H).sum(axis=1)                  # (TB, H) f32

    logits = jnp.dot(pooled, w2_ref[...],
                     preferred_element_type=jnp.float32) + b2_ref[...]
    o_ref[...] = logits.astype(o_ref.dtype)                   # (TB, C) slab store


# ---------------------------------------------------------------------------
# Tiling helpers (lane-padded VMEM budgeting, generation-aware TB)
# ---------------------------------------------------------------------------
def _round_up(v, m):
    return -(-v // m) * m


def _x_tile_bytes(N, itemsize):
    # One sample's (N, N) slab as it sits in VMEM: sublane pads to 8, lane to 128.
    return _round_up(N, 8) * _round_up(N, 128) * itemsize


def _h_tile_bytes(N, H):
    # One sample's rows of the f32 intermediate h: H lane-pads to 128.
    return _round_up(N, 8) * _round_up(H, 128) * 4


def _device_info():
    """(num_tensorcores, vmem_budget_for_x_tiles, physical_vmem)."""
    num_tc, phys = 1, 128 << 20                     # v5e / v6e defaults
    try:
        kind = jax.devices()[0].device_kind.lower()
        if "v7" in kind or "tpu7" in kind:
            num_tc, phys = 2, 64 << 20              # v7x: 2 TCs, 64 MiB VMEM/TC
    except Exception:
        pass
    try:
        phys = int(pltpu.get_tpu_info().vmem_capacity_bytes)
    except Exception:
        pass
    budget = min(phys // 3, 40 << 20)               # headroom: weights, compiler scratch
    return num_tc, budget, phys


def _choose_tb(B, N, H, num_tc, budget_bytes, itemsize):
    """Per-step batch tile.
      * 2x double-buffered x tile + f32 h intermediate must fit `budget_bytes`
        (all sizes lane-padded).
      * TB is a multiple of 8 (sublane-aligned (TB, C) output block) or == B.
      * On v7x (2 TCs) prefer an even number of grid steps >= 2; on single-TC
        chips maximize TB (one grid step is fine)."""
    per_sample = 2 * _x_tile_bytes(N, itemsize) + _h_tile_bytes(N, H)
    cap = max(1, budget_bytes // per_sample)
    if B <= 8:
        return B
    if num_tc == 1:
        tb = min(cap, B)
    else:
        steps = max(2, pl.cdiv(B, min(cap, B)))
        if steps % 2:
            steps += 1
        tb = pl.cdiv(B, steps)
    if tb >= B:
        return B
    return max(8, (tb // 8) * 8)


# ---------------------------------------------------------------------------
# Wrapper
# ---------------------------------------------------------------------------
def graph_analysis_mlp(x, w1, b1, w2, b2):
    """x: (B, N, N); returns (B, cout) f32.  No host-side copies of x."""
    B, N, _ = x.shape
    H = w1.shape[1]
    C = w2.shape[1]

    num_tc, budget, phys = _device_info()
    itemsize = jnp.dtype(x.dtype).itemsize
    TB = _choose_tb(B, N, H, num_tc, budget, itemsize)
    grid = pl.cdiv(B, TB)          # ragged last block (if any) is masked on store

    # Weights: W1 matches x's dtype for the MXU; W2/biases stay f32 (tiny).
    # Fold the mean's 1/N into W2 once here.
    w1_c = w1.astype(x.dtype)
    w2_s = w2.astype(jnp.float32) / jnp.float32(N)
    b1_2d = b1.reshape(1, H).astype(jnp.float32)
    b2_2d = b2.reshape(1, C).astype(jnp.float32)

    # VMEM limit from the actual (lane-padded) footprint.
    x_s = _x_tile_bytes(N, itemsize)
    h_s = _h_tile_bytes(N, H)
    w_bytes = (_round_up(N, 8) * _round_up(H, 128)
               + _round_up(H, 8) * _round_up(C, 128) + 2 * 128) * 4
    needed = TB * (2 * x_s + h_s) + 2 * w_bytes + (1 << 20)
    vmem_limit = int(min(max(needed, 32 << 20), (phys * 3) // 4))

    out = pl.pallas_call(
        _mlp_kernel,
        out_shape=jax.ShapeDtypeStruct((B, C), jnp.float32),
        grid_spec=pltpu.PrefetchScalarGridSpec(
            num_scalar_prefetch=0,
            grid=(grid,),
            in_specs=[
                pl.BlockSpec((TB, N, N), lambda b: (b, 0, 0)),   # x tile
                pl.BlockSpec((N, H), lambda b: (0, 0)),          # W1 (resident)
                pl.BlockSpec((1, H), lambda b: (0, 0)),          # b1
                pl.BlockSpec((H, C), lambda b: (0, 0)),          # W2/N
                pl.BlockSpec((1, C), lambda b: (0, 0)),          # b2
            ],
            out_specs=pl.BlockSpec((TB, C), lambda b: (b, 0)),
        ),
        compiler_params=pltpu.CompilerParams(
            dimension_semantics=("parallel",),
            vmem_limit_bytes=vmem_limit),
    )(x, w1_c, b1_2d, w2_s, b2_2d)

    return out


def graph_analysis_forward(x, identity, epoch, params):
    # model_name == 'mlp': identity and epoch are unused (matches PyTorch forward).
    del identity, epoch
    return graph_analysis_mlp(x, params["w1"], params["b1"],
                              params["w2"], params["b2"])


def init_params(num_of_node, hidden, cout, key):
    """Deterministic synthetic parameter init (shapes from module __init__)."""
    k1, k2 = jax.random.split(key)
    w1 = jax.random.normal(k1, (num_of_node, hidden), jnp.float32) * 0.1
    b1 = jnp.zeros((hidden,), jnp.float32)
    w2 = jax.random.normal(k2, (hidden, cout), jnp.float32) * 0.1
    b2 = jnp.zeros((cout,), jnp.float32)
    return {"w1": w1, "b1": b1, "w2": w2, "b2": b2}


if __name__ == "__main__":
    # Small shapes consistent with the module: num_of_node=16, hidden=32, cout=2.
    B, N, H, C = 16, 16, 32, 2
    key = jax.random.PRNGKey(0)
    kx, kp = jax.random.split(key)

    x = jax.random.normal(kx, (B, N, N), jnp.float32)     # connectivity matrices
    identity = jnp.eye(N, dtype=jnp.float32)              # unused in 'mlp' branch
    params = init_params(N, H, C, kp)

    out = graph_analysis_forward(x, identity, epoch=0, params=params)
    out = jax.block_until_ready(out)

    # Reference in plain JAX (original op order: linear2 then mean-pool).
    h_ref = jnp.maximum(jnp.einsum("bnk,kh->bnh", x, params["w1"]) + params["b1"], 0.0)
    ref = jnp.mean(jnp.einsum("bnh,hc->bnc", h_ref, params["w2"]) + params["b2"], axis=1)
    assert out.shape == (B, C)
    assert jnp.allclose(out, ref, atol=1e-5, rtol=1e-5), (out, ref)

    print("KERNEL_OK")
</pallas_src>

<mosaic_0001>
module attributes {stable_mosaic.version = 11 : i64} {
  func.func @_mlp_kernel(%arg0: i32, %arg1: memref<16x16x16xf32, #tpu.memory_space<vmem>>, %arg2: memref<16x32xf32, #tpu.memory_space<vmem>>, %arg3: memref<1x32xf32, #tpu.memory_space<vmem>>, %arg4: memref<32x2xf32, #tpu.memory_space<vmem>>, %arg5: memref<1x2xf32, #tpu.memory_space<vmem>>, %arg6: memref<16x2xf32, #tpu.memory_space<vmem>>) attributes {dimension_semantics = [#tpu.dimension_semantics<parallel>], iteration_bounds = array<i64: 1>, scalar_prefetch = 0 : i64, scratch_operands = 0 : i64, tpu.core_type = #tpu.core_type<tc>, window_params = [{transform_indices = @transform_0, window_bounds = array<i64: 16, 16, 16>}, {pipeline_mode = #tpu.pipeline_mode<synchronous>, transform_indices = @transform_1, window_bounds = array<i64: 16, 32>}, {pipeline_mode = #tpu.pipeline_mode<synchronous>, transform_indices = @transform_2, window_bounds = array<i64: 1, 32>}, {pipeline_mode = #tpu.pipeline_mode<synchronous>, transform_indices = @transform_3, window_bounds = array<i64: 32, 2>}, {pipeline_mode = #tpu.pipeline_mode<synchronous>, transform_indices = @transform_4, window_bounds = array<i64: 1, 2>}, {transform_indices = @transform_5, window_bounds = array<i64: 16, 2>}]} {
    %c0 = arith.constant 0 : index
    %c0_0 = arith.constant 0 : index
    %c0_1 = arith.constant 0 : index
    %0 = vector.load %arg1[%c0, %c0_0, %c0_1] : memref<16x16x16xf32, #tpu.memory_space<vmem>>, vector<16x16x16xf32>
    %1 = vector.shape_cast %0 : vector<16x16x16xf32> to vector<256x16xf32>
    %c0_2 = arith.constant 0 : index
    %c0_3 = arith.constant 0 : index
    %2 = vector.load %arg2[%c0_2, %c0_3] : memref<16x32xf32, #tpu.memory_space<vmem>>, vector<16x32xf32>
    %cst = arith.constant dense<0.000000e+00> : vector<256x32xf32>
    %3 = tpu.matmul %1, %2, %cst {dimension_numbers = #tpu.dot_dimension_numbers<[1], [0], [0], [1], [0, 0, 1, 1], [], []>} : vector<256x16xf32>, vector<16x32xf32>, vector<256x32xf32> -> vector<256x32xf32>
    %c0_4 = arith.constant 0 : index
    %c0_5 = arith.constant 0 : index
    %4 = vector.load %arg3[%c0_4, %c0_5] : memref<1x32xf32, #tpu.memory_space<vmem>>, vector<1x32xf32>
    %5 = vector.broadcast %4 : vector<1x32xf32> to vector<256x32xf32>
    %6 = arith.addf %3, %5 : vector<256x32xf32>
    %cst_6 = arith.constant 0.000000e+00 : f32
    %7 = vector.broadcast %cst_6 : f32 to vector<256x32xf32>
    %8 = arith.maximumf %6, %7 : vector<256x32xf32>
    %9 = vector.shape_cast %8 : vector<256x32xf32> to vector<16x16x32xf32>
    %cst_7 = arith.constant dense<0.000000e+00> : vector<16x32xf32>
    %10 = vector.multi_reduction <add>, %9, %cst_7 [1] : vector<16x16x32xf32> to vector<16x32xf32>
    %c0_8 = arith.constant 0 : index
    %c0_9 = arith.constant 0 : index
    %11 = vector.load %arg4[%c0_8, %c0_9] : memref<32x2xf32, #tpu.memory_space<vmem>>, vector<32x2xf32>
    %cst_10 = arith.constant dense<0.000000e+00> : vector<16x2xf32>
    %12 = tpu.matmul %10, %11, %cst_10 {dimension_numbers = #tpu.dot_dimension_numbers<[1], [0], [0], [1], [0, 0, 1, 1], [], []>} : vector<16x32xf32>, vector<32x2xf32>, vector<16x2xf32> -> vector<16x2xf32>
    %c0_11 = arith.constant 0 : index
    %c0_12 = arith.constant 0 : index
    %13 = vector.load %arg5[%c0_11, %c0_12] : memref<1x2xf32, #tpu.memory_space<vmem>>, vector<1x2xf32>
    %14 = vector.broadcast %13 : vector<1x2xf32> to vector<16x2xf32>
    %15 = arith.addf %12, %14 : vector<16x2xf32>
    %c0_13 = arith.constant 0 : index
    %c0_14 = arith.constant 0 : index
    %16 = vector.load %arg6[%c0_13, %c0_14] : memref<16x2xf32, #tpu.memory_space<vmem>>, vector<16x2xf32>
    tpu.vector_store %arg6[%c0_13, %c0_14], %15 {strides = array<i32>} : memref<16x2xf32, #tpu.memory_space<vmem>>, vector<16x2xf32>,
    return
  }
  func.func @transform_0(%arg0: i32) -> (i32, i32, i32) {
    %c0_i32 = arith.constant 0 : i32
    %c0_i32_0 = arith.constant 0 : i32
    %c0_i32_1 = arith.constant 0 : i32
    return %arg0, %c0_i32, %c0_i32_0 : i32, i32, i32
  }
  func.func @transform_1(%arg0: i32) -> (i32, i32) {
    %c0_i32 = arith.constant 0 : i32
    %c0_i32_0 = arith.constant 0 : i32
    %c0_i32_1 = arith.constant 0 : i32
    return %c0_i32, %c0_i32_0 : i32, i32
  }
  func.func @transform_2(%arg0: i32) -> (i32, i32) {
    %c0_i32 = arith.constant 0 : i32
    %c0_i32_0 = arith.constant 0 : i32
    %c0_i32_1 = arith.constant 0 : i32
    return %c0_i32, %c0_i32_0 : i32, i32
  }
  func.func @transform_3(%arg0: i32) -> (i32, i32) {
    %c0_i32 = arith.constant 0 : i32
    %c0_i32_0 = arith.constant 0 : i32
    %c0_i32_1 = arith.constant 0 : i32
    return %c0_i32, %c0_i32_0 : i32, i32
  }
  func.func @transform_4(%arg0: i32) -> (i32, i32) {
    %c0_i32 = arith.constant 0 : i32
    %c0_i32_0 = arith.constant 0 : i32
    %c0_i32_1 = arith.constant 0 : i32
    return %c0_i32, %c0_i32_0 : i32, i32
  }
  func.func @transform_5(%arg0: i32) -> (i32, i32) {
    %c0_i32 = arith.constant 0 : i32
    %c0_i32_0 = arith.constant 0 : i32
    return %arg0, %c0_i32 : i32, i32
  }
}

</mosaic_0001>

<llo_original>
// kernel: tpu_custom_call.1
$region0: #{tpu_custom_call.1}
  #allocation0 [shape = 'u32[]', space=smem, size = 0x4, offset = 0x4, fixed_abs, tag = 'smem constant byte address 0x4 - core index']
  #allocation1 [shape = 'u32[144,128]{1,0:T(1,128)}', space=vmem, size = 0x12000, scoped, tag = 'internal scratch']
  %s0 = inlined_call_operand.hbm [shape: f32[16,16,16], index: 0, kind: input, shape index: {}]
  %s1 = inlined_call_operand.vmem [shape: f32[16,32], index: 1, kind: input, shape index: {}]
  %s2 = inlined_call_operand.vmem [shape: f32[1,32], index: 2, kind: input, shape index: {}]
  %s3 = inlined_call_operand.vmem [shape: f32[32,2], index: 3, kind: input, shape index: {}]
  %s4 = inlined_call_operand.vmem [shape: f32[1,2], index: 4, kind: input, shape index: {}]
  %s5 = inlined_call_operand.vmem [shape: f32[16,2], index: 5, kind: output, shape index: {}]
  %s6 = sld [smem:[#allocation0]]
  $region34: #{tpu_custom_call.1} parent=0
    _
  %s8 = ssub.s32 1, %s6
  %s9 = scalar_select 0, %s8, %s6
  $region1: #{tpu_custom_call.1} parent=0
    #allocation2 [shape = 'u8[131072]{0}', space=vmem, size = 0x20000, scoped, tag = 'input window, operand 0, single buffered']
    #allocation3 [shape = 's32[1]{0}', space=sflag, size = 0x4, scoped, tag = 'scoped memory for tpu_custom_call.1']
    %10 = vsyncpa [#allocation3], 0
    // Predicated region
    $region2: #{tpu_custom_call.1} parent=1 // pred_check
      _
    $region3: #{tpu_custom_call.1} parent=1 // pred_check_branch
      %12 = sbr.rel (0) target = $region5
    $region4: #{tpu_custom_call.1} parent=1 // pred_region
      %s14 = ssub.s32 4096, 4096
      %15 = vsyncadd [#allocation3], %s14
      %s16 = sshll.u32 [#allocation2], 4
      %s17 = int_to_ptr.vmem [resolvable:$true] %s16
      %22 = dma.hbm_to_vmem [thread:$0]  %s0, 4096, %s17, [#allocation3], 128, 128, 8
    $region5: #{tpu_custom_call.1} parent=1 // pred_fallthru
      _
    // Predicated region
    $region6: #{tpu_custom_call.1} parent=1 // pred_check
      _
    $region7: #{tpu_custom_call.1} parent=1 // pred_check_branch
      %24 = sbr.rel (0) target = $region9
    $region8: #{tpu_custom_call.1} parent=1 // pred_region
      _
    $region9: #{tpu_custom_call.1} parent=1 // pred_fallthru
      _
    // Predicated region
    $region10: #{tpu_custom_call.1} parent=1 // pred_check
      _
    $region11: #{tpu_custom_call.1} parent=1 // pred_check_branch
      %26 = sbr.rel (0) target = $region13
    $region12: #{tpu_custom_call.1} parent=1 // pred_region
      _
    $region13: #{tpu_custom_call.1} parent=1 // pred_fallthru
      _
    // Predicated region
    $region14: #{tpu_custom_call.1} parent=1 // pred_check
      _
    $region15: #{tpu_custom_call.1} parent=1 // pred_check_branch
      %28 = sbr.rel (0) target = $region17
    $region16: #{tpu_custom_call.1} parent=1 // pred_region
      _
    $region17: #{tpu_custom_call.1} parent=1 // pred_fallthru
      _
    // Predicated region
    $region18: #{tpu_custom_call.1} parent=1 // pred_check
      _
    $region19: #{tpu_custom_call.1} parent=1 // pred_check_branch
      %30 = sbr.rel (0) target = $region21
    $region20: #{tpu_custom_call.1} parent=1 // pred_region
      _
    $region21: #{tpu_custom_call.1} parent=1 // pred_fallthru
      _
    // Predicated region
    $region22: #{tpu_custom_call.1} parent=1 // pred_check
      _
    $region23: #{tpu_custom_call.1} parent=1 // pred_check_branch
      %32 = sbr.rel (0) target = $region25
    $region24: #{tpu_custom_call.1} parent=1 // pred_region
      %33 = dma.done [#allocation3], 4096
    $region25: #{tpu_custom_call.1} parent=1 // pred_fallthru
      _
    %v34 = vld [vmem:[#allocation2] sm:$0xff]
    %v35 = vld [vmem:[#allocation2 + $0x8] sm:$0xff]
    %v36 = vld [vmem:[#allocation2 + $0x10] sm:$0xff]
    %v37 = vld [vmem:[#allocation2 + $0x18] sm:$0xff]
    %v38 = vld [vmem:[#allocation2 + $0x20] sm:$0xff]
    %v39 = vld [vmem:[#allocation2 + $0x28] sm:$0xff]
    %v40 = vld [vmem:[#allocation2 + $0x30] sm:$0xff]
    %v41 = vld [vmem:[#allocation2 + $0x38] sm:$0xff]
    %v42 = vld [vmem:[#allocation2 + $0x40] sm:$0xff]
    %v43 = vld [vmem:[#allocation2 + $0x48] sm:$0xff]
    %v44 = vld [vmem:[#allocation2 + $0x50] sm:$0xff]
    %v45 = vld [vmem:[#allocation2 + $0x58] sm:$0xff]
    %v46 = vld [vmem:[#allocation2 + $0x60] sm:$0xff]
    %v47 = vld [vmem:[#allocation2 + $0x68] sm:$0xff]
    %v48 = vld [vmem:[#allocation2 + $0x70] sm:$0xff]
    %v49 = vld [vmem:[#allocation2 + $0x78] sm:$0xff]
    %v50 = vld [vmem:[#allocation2 + $0x80] sm:$0xff]
    %v51 = vld [vmem:[#allocation2 + $0x88] sm:$0xff]
    %v52 = vld [vmem:[#allocation2 + $0x90] sm:$0xff]
    %v53 = vld [vmem:[#allocation2 + $0x98] sm:$0xff]
    %v54 = vld [vmem:[#allocation2 + $0xa0] sm:$0xff]
    %v55 = vld [vmem:[#allocation2 + $0xa8] sm:$0xff]
    %v56 = vld [vmem:[#allocation2 + $0xb0] sm:$0xff]
    %v57 = vld [vmem:[#allocation2 + $0xb8] sm:$0xff]
    %v58 = vld [vmem:[#allocation2 + $0xc0] sm:$0xff]
    %v59 = vld [vmem:[#allocation2 + $0xc8] sm:$0xff]
    %v60 = vld [vmem:[#allocation2 + $0xd0] sm:$0xff]
    %v61 = vld [vmem:[#allocation2 + $0xd8] sm:$0xff]
    %v62 = vld [vmem:[#allocation2 + $0xe0] sm:$0xff]
    %v63 = vld [vmem:[#allocation2 + $0xe8] sm:$0xff]
    %v64 = vld [vmem:[#allocation2 + $0xf0] sm:$0xff]
    %v65 = vld [vmem:[#allocation2 + $0xf8] sm:$0xff]
    %v66 = vld [vmem:[%s1] sm:$0xff]
    %v67 = vld [vmem:[%s1 + $0x8] sm:$0xff]
    %v68 = vld [vmem:[%s2] sm:$0x1]
    %v70 = vlaneseq
    %v71 = vshrl.u32 %v70, 7
    %v72 = vsub.s32 0, %v71
    %v73 = vrot.slane %v68, %v72
    %vm75 = vcmask 130048
    %v77 = vsel %vm75, %v34, 0
    %v80 = vsel %vm75, %v35, 0
    %v83 = vsel %vm75, %v36, 0
    %v86 = vsel %vm75, %v37, 0
    %v89 = vsel %vm75, %v38, 0
    %v92 = vsel %vm75, %v39, 0
    %v95 = vsel %vm75, %v40, 0
    %v98 = vsel %vm75, %v41, 0
    %v101 = vsel %vm75, %v42, 0
    %v104 = vsel %vm75, %v43, 0
    %v107 = vsel %vm75, %v44, 0
    %v110 = vsel %vm75, %v45, 0
    %v113 = vsel %vm75, %v46, 0
    %v116 = vsel %vm75, %v47, 0
    %v119 = vsel %vm75, %v48, 0
    %v122 = vsel %vm75, %v49, 0
    %v125 = vsel %vm75, %v50, 0
    %v128 = vsel %vm75, %v51, 0
    %v131 = vsel %vm75, %v52, 0
    %v134 = vsel %vm75, %v53, 0
    %v137 = vsel %vm75, %v54, 0
    %v140 = vsel %vm75, %v55, 0
    %v143 = vsel %vm75, %v56, 0
    %v146 = vsel %vm75, %v57, 0
    %v149 = vsel %vm75, %v58, 0
    %v152 = vsel %vm75, %v59, 0
    %v155 = vsel %vm75, %v60, 0
    %v158 = vsel %vm75, %v61, 0
    %v161 = vsel %vm75, %v62, 0
    %v164 = vsel %vm75, %v63, 0
    %v167 = vsel %vm75, %v64, 0
    %v170 = vsel %vm75, %v65, 0
    %172 = vmatprep.subr.mxu0 0.0
    %173 = vmatpush1.msra.mxu0 0.0
    %174 = vmatprep.subr.mxu0 0.0
    %175 = vmatpush1.msra.mxu0 0.0
    %176 = vmatprep.subr.mxu0 0.0
    %177 = vmatpush1.msra.mxu0 0.0
    %178 = vmatprep.subr.mxu0 0.0
    %179 = vmatpush1.msra.mxu0 0.0
    %180 = vmatprep.subr.mxu0 0.0
    %181 = vmatpush1.msra.mxu0 0.0
    %182 = vmatprep.subr.mxu0 0.0
    %183 = vmatpush1.msra.mxu0 0.0
    %184 = vmatprep.subr.mxu0 0.0
    %185 = vmatpush1.msra.mxu0 0.0
    %186 = vmatprep.subr.mxu0 0.0
    %187 = vmatpush1.msra.mxu0 0.0
    %188 = vmatprep.subr.mxu0 0.0
    %189 = vmatpush1.msra.mxu0 0.0
    %190 = vmatprep.subr.mxu0 0.0
    %191 = vmatpush1.msra.mxu0 0.0
    %192 = vmatprep.subr.mxu0 0.0
    %193 = vmatpush1.msra.mxu0 0.0
    %194 = vmatprep.subr.mxu0 0.0
    %195 = vmatpush1.msra.mxu0 0.0
    %196 = vmatprep.subr.mxu0 0.0
    %197 = vmatpush1.msra.mxu0 0.0
    %198 = vmatprep.subr.mxu0 0.0
    %199 = vmatpush1.msra.mxu0 0.0
    %200 = vmatprep.subr.mxu0 0.0
    %201 = vmatpush1.msra.mxu0 %v67
    %202 = vmatprep.subr.mxu0 0.0
    %203 = vmatpush1.msra.mxu0 %v66
    %204 = vmatprep.subr.mxu0 0.0
    %205 = vmatpush2.msra.mxu0 0.0
    %206 = vmatprep.subr.mxu0 0.0
    %207 = vmatpush2.msra.mxu0 0.0
    %208 = vmatprep.subr.mxu0 0.0
    %209 = vmatpush2.msra.mxu0 0.0
    %210 = vmatprep.subr.mxu0 0.0
    %211 = vmatpush2.msra.mxu0 0.0
    %212 = vmatprep.subr.mxu0 0.0
    %213 = vmatpush2.msra.mxu0 0.0
    %214 = vmatprep.subr.mxu0 0.0
    %215 = vmatpush2.msra.mxu0 0.0
    %216 = vmatprep.subr.mxu0 0.0
    %217 = vmatpush2.msra.mxu0 0.0
    %218 = vmatprep.subr.mxu0 0.0
    %219 = vmatpush2.msra.mxu0 0.0
    %220 = vmatprep.subr.mxu0 0.0
    %221 = vmatpush2.msra.mxu0 0.0
    %222 = vmatprep.subr.mxu0 0.0
    %223 = vmatpush2.msra.mxu0 0.0
    %224 = vmatprep.subr.mxu0 0.0
    %225 = vmatpush2.msra.mxu0 0.0
    %226 = vmatprep.subr.mxu0 0.0
    %227 = vmatpush2.msra.mxu0 0.0
    %228 = vmatprep.subr.mxu0 0.0
    %229 = vmatpush2.msra.mxu0 0.0
    %230 = vmatprep.subr.mxu0 0.0
    %231 = vmatpush2.msra.mxu0 0.0
    %232 = vmatprep.subr.mxu0 0.0
    %233 = vmatpush2.msra.mxu0 0.0
    %234 = vmatprep.subr.mxu0 0.0
    %235 = vmatpush2.msra.mxu0 0.0
    %236 = vmatprep.mubr.f32.mxu0 0.0
    %237 = vmatmul.mubr.f32.gmra.mxu0 %v77
    %v238 = vpop.f32.mrf.mxu0
    %v239 = vadd.f32 %v73, %v238
    %v240 = vpop.f32.mrf.mxu0
    %241 = vmatprep.mubr.f32.mxu0 0.0
    %242 = vmatmul.mubr.f32.gmra.mxu0 %v80
    %v243 = vpop.f32.mrf.mxu0
    %v244 = vadd.f32 %v73, %v243
    %v245 = vpop.f32.mrf.mxu0
    %246 = vmatprep.mubr.f32.mxu0 0.0
    %247 = vmatmul.mubr.f32.gmra.mxu0 %v83
    %v248 = vpop.f32.mrf.mxu0
    %v249 = vadd.f32 %v73, %v248
    %v250 = vpop.f32.mrf.mxu0
    %251 = vmatprep.mubr.f32.mxu0 0.0
    %252 = vmatmul.mubr.f32.gmra.mxu0 %v86
    %v253 = vpop.f32.mrf.mxu0
    %v254 = vadd.f32 %v73, %v253
    %v255 = vpop.f32.mrf.mxu0
    %256 = vmatprep.mubr.f32.mxu0 0.0
    %257 = vmatmul.mubr.f32.gmra.mxu0 %v89
    %v258 = vpop.f32.mrf.mxu0
    %v259 = vadd.f32 %v73, %v258
    %v260 = vpop.f32.mrf.mxu0
    %261 = vmatprep.mubr.f32.mxu0 0.0
    %262 = vmatmul.mubr.f32.gmra.mxu0 %v92
    %v263 = vpop.f32.mrf.mxu0
    %v264 = vadd.f32 %v73, %v263
    %v265 = vpop.f32.mrf.mxu0
    %266 = vmatprep.mubr.f32.mxu0 0.0
    %267 = vmatmul.mubr.f32.gmra.mxu0 %v95
    %v268 = vpop.f32.mrf.mxu0
    %v269 = vadd.f32 %v73, %v268
    %v270 = vpop.f32.mrf.mxu0
    %271 = vmatprep.mubr.f32.mxu0 0.0
    %272 = vmatmul.mubr.f32.gmra.mxu0 %v98
    %v273 = vpop.f32.mrf.mxu0
    %v274 = vadd.f32 %v73, %v273
    %v275 = vpop.f32.mrf.mxu0
    %276 = vmatprep.mubr.f32.mxu0 0.0
    %277 = vmatmul.mubr.f32.gmra.mxu0 %v101
    %v278 = vpop.f32.mrf.mxu0
    %v279 = vadd.f32 %v73, %v278
    %v280 = vpop.f32.mrf.mxu0
    %281 = vmatprep.mubr.f32.mxu0 0.0
    %282 = vmatmul.mubr.f32.gmra.mxu0 %v104
    %v283 = vpop.f32.mrf.mxu0
    %v284 = vadd.f32 %v73, %v283
    %v285 = vpop.f32.mrf.mxu0
    %286 = vmatprep.mubr.f32.mxu0 0.0
    %287 = vmatmul.mubr.f32.gmra.mxu0 %v107
    %v288 = vpop.f32.mrf.mxu0
    %v289 = vadd.f32 %v73, %v288
    %v290 = vpop.f32.mrf.mxu0
    %291 = vmatprep.mubr.f32.mxu0 0.0
    %292 = vmatmul.mubr.f32.gmra.mxu0 %v110
    %v293 = vpop.f32.mrf.mxu0
    %v294 = vadd.f32 %v73, %v293
    %v295 = vpop.f32.mrf.mxu0
    %296 = vmatprep.mubr.f32.mxu0 0.0
    %297 = vmatmul.mubr.f32.gmra.mxu0 %v113
    %v298 = vpop.f32.mrf.mxu0
    %v299 = vadd.f32 %v73, %v298
    %v300 = vpop.f32.mrf.mxu0
    %301 = vmatprep.mubr.f32.mxu0 0.0
    %302 = vmatmul.mubr.f32.gmra.mxu0 %v116
    %v303 = vpop.f32.mrf.mxu0
    %v304 = vadd.f32 %v73, %v303
    %v305 = vpop.f32.mrf.mxu0
    %306 = vmatprep.mubr.f32.mxu0 0.0
    %307 = vmatmul.mubr.f32.gmra.mxu0 %v119
    %v308 = vpop.f32.mrf.mxu0
    %v309 = vadd.f32 %v73, %v308
    %v310 = vpop.f32.mrf.mxu0
    %311 = vmatprep.mubr.f32.mxu0 0.0
    %312 = vmatmul.mubr.f32.gmra.mxu0 %v122
    %v313 = vpop.f32.mrf.mxu0
    %v314 = vadd.f32 %v73, %v313
    %v315 = vpop.f32.mrf.mxu0
    %316 = vmatprep.mubr.f32.mxu0 0.0
    %317 = vmatmul.mubr.f32.gmra.mxu0 %v125
    %v318 = vpop.f32.mrf.mxu0
    %v319 = vadd.f32 %v73, %v318
    %v320 = vpop.f32.mrf.mxu0
    %321 = vmatprep.mubr.f32.mxu0 0.0
    %322 = vmatmul.mubr.f32.gmra.mxu0 %v128
    %v323 = vpop.f32.mrf.mxu0
    %v324 = vadd.f32 %v73, %v323
    %v325 = vpop.f32.mrf.mxu0
    %326 = vmatprep.mubr.f32.mxu0 0.0
    %327 = vmatmul.mubr.f32.gmra.mxu0 %v131
    %v328 = vpop.f32.mrf.mxu0
    %v329 = vadd.f32 %v73, %v328
    %v330 = vpop.f32.mrf.mxu0
    %331 = vmatprep.mubr.f32.mxu0 0.0
    %332 = vmatmul.mubr.f32.gmra.mxu0 %v134
    %v333 = vpop.f32.mrf.mxu0
    %v334 = vadd.f32 %v73, %v333
    %v335 = vpop.f32.mrf.mxu0
    %336 = vmatprep.mubr.f32.mxu0 0.0
    %337 = vmatmul.mubr.f32.gmra.mxu0 %v137
    %v338 = vpop.f32.mrf.mxu0
    %v339 = vadd.f32 %v73, %v338
    %v340 = vpop.f32.mrf.mxu0
    %341 = vmatprep.mubr.f32.mxu0 0.0
    %342 = vmatmul.mubr.f32.gmra.mxu0 %v140
    %v343 = vpop.f32.mrf.mxu0
    %v344 = vadd.f32 %v73, %v343
    %v345 = vpop.f32.mrf.mxu0
    %346 = vmatprep.mubr.f32.mxu0 0.0
    %347 = vmatmul.mubr.f32.gmra.mxu0 %v143
    %v348 = vpop.f32.mrf.mxu0
    %v349 = vadd.f32 %v73, %v348
    %v350 = vpop.f32.mrf.mxu0
    %351 = vmatprep.mubr.f32.mxu0 0.0
    %352 = vmatmul.mubr.f32.gmra.mxu0 %v146
    %v353 = vpop.f32.mrf.mxu0
    %v354 = vadd.f32 %v73, %v353
    %v355 = vpop.f32.mrf.mxu0
    %356 = vmatprep.mubr.f32.mxu0 0.0
    %357 = vmatmul.mubr.f32.gmra.mxu0 %v149
    %v358 = vpop.f32.mrf.mxu0
    %v359 = vadd.f32 %v73, %v358
    %v360 = vpop.f32.mrf.mxu0
    %361 = vmatprep.mubr.f32.mxu0 0.0
    %362 = vmatmul.mubr.f32.gmra.mxu0 %v152
    %v363 = vpop.f32.mrf.mxu0
    %v364 = vadd.f32 %v73, %v363
    %v365 = vpop.f32.mrf.mxu0
    %366 = vmatprep.mubr.f32.mxu0 0.0
    %367 = vmatmul.mubr.f32.gmra.mxu0 %v155
    %v368 = vpop.f32.mrf.mxu0
    %v369 = vadd.f32 %v73, %v368
    %v370 = vpop.f32.mrf.mxu0
    %371 = vmatprep.mubr.f32.mxu0 0.0
    %372 = vmatmul.mubr.f32.gmra.mxu0 %v158
    %v373 = vpop.f32.mrf.mxu0
    %v374 = vadd.f32 %v73, %v373
    %v375 = vpop.f32.mrf.mxu0
    %376 = vmatprep.mubr.f32.mxu0 0.0
    %377 = vmatmul.mubr.f32.gmra.mxu0 %v161
    %v378 = vpop.f32.mrf.mxu0
    %v379 = vadd.f32 %v73, %v378
    %v380 = vpop.f32.mrf.mxu0
    %381 = vmatprep.mubr.f32.mxu0 0.0
    %382 = vmatmul.mubr.f32.gmra.mxu0 %v164
    %v383 = vpop.f32.mrf.mxu0
    %v384 = vadd.f32 %v73, %v383
    %v385 = vpop.f32.mrf.mxu0
    %386 = vmatprep.mubr.f32.mxu0 0.0
    %387 = vmatmul.mubr.f32.gmra.mxu0 %v167
    %v388 = vpop.f32.mrf.mxu0
    %v389 = vadd.f32 %v73, %v388
    %v390 = vpop.f32.mrf.mxu0
    %391 = vmatprep.mubr.f32.mxu0 0.0
    %392 = vmatmul.mubr.f32.gmra.mxu0 %v170
    %v393 = vpop.f32.mrf.mxu0
    %v394 = vadd.f32 %v73, %v393
    %v395 = vpop.f32.mrf.mxu0
    %396 = vdwg.mxu0
    %v397 = vmax.f32 %v239, 0.0
    %v398 = vmax.f32 %v244, 0.0
    %v399 = vmax.f32 %v249, 0.0
    %v400 = vmax.f32 %v254, 0.0
    %v401 = vmax.f32 %v259, 0.0
    %v402 = vmax.f32 %v264, 0.0
    %v403 = vmax.f32 %v269, 0.0
    %v404 = vmax.f32 %v274, 0.0
    %v405 = vmax.f32 %v279, 0.0
    %v406 = vmax.f32 %v284, 0.0
    %v407 = vmax.f32 %v289, 0.0
    %v408 = vmax.f32 %v294, 0.0
    %v409 = vmax.f32 %v299, 0.0
    %v410 = vmax.f32 %v304, 0.0
    %v411 = vmax.f32 %v309, 0.0
    %v412 = vmax.f32 %v314, 0.0
    %v413 = vmax.f32 %v319, 0.0
    %v414 = vmax.f32 %v324, 0.0
    %v415 = vmax.f32 %v329, 0.0
    %v416 = vmax.f32 %v334, 0.0
    %v417 = vmax.f32 %v339, 0.0
    %v418 = vmax.f32 %v344, 0.0
    %v419 = vmax.f32 %v349, 0.0
    %v420 = vmax.f32 %v354, 0.0
    %v421 = vmax.f32 %v359, 0.0
    %v422 = vmax.f32 %v364, 0.0
    %v423 = vmax.f32 %v369, 0.0
    %v424 = vmax.f32 %v374, 0.0
    %v425 = vmax.f32 %v379, 0.0
    %v426 = vmax.f32 %v384, 0.0
    %v427 = vmax.f32 %v389, 0.0
    %v428 = vmax.f32 %v394, 0.0
    %vm429 = vcmask 261120
    %v430 = vsel %vm429, %v397, 0.0
    %v431 = vsel %vm429, %v398, 0.0
    %v432 = vadd.f32 %v430, %v431
    %v433 = vrot.slane %v432, 4
    %v434 = vadd.f32 %v432, %v433
    %v435 = vrot.slane %v434, 2
    %v436 = vadd.f32 %v434, %v435
    %v437 = vrot.slane %v436, 1
    %v438 = vadd.f32 %v436, %v437
    %v439 = vsel %vm429, %v399, 0.0
    %v440 = vsel %vm429, %v400, 0.0
    %v441 = vadd.f32 %v439, %v440
    %v442 = vrot.slane %v441, 4
    %v443 = vadd.f32 %v441, %v442
    %v444 = vrot.slane %v443, 2
    %v445 = vadd.f32 %v443, %v444
    %v446 = vrot.slane %v445, 1
    %v447 = vadd.f32 %v445, %v446
    %v448 = vsel %vm429, %v401, 0.0
    %v449 = vsel %vm429, %v402, 0.0
    %v450 = vadd.f32 %v448, %v449
    %v451 = vrot.slane %v450, 4
    %v452 = vadd.f32 %v450, %v451
    %v453 = vrot.slane %v452, 2
    %v454 = vadd.f32 %v452, %v453
    %v455 = vrot.slane %v454, 1
    %v456 = vadd.f32 %v454, %v455
    %v457 = vsel %vm429, %v403, 0.0
    %v458 = vsel %vm429, %v404, 0.0
    %v459 = vadd.f32 %v457, %v458
    %v460 = vrot.slane %v459, 4
    %v461 = vadd.f32 %v459, %v460
    %v462 = vrot.slane %v461, 2
    %v463 = vadd.f32 %v461, %v462
    %v464 = vrot.slane %v463, 1
    %v465 = vadd.f32 %v463, %v464
    %v466 = vsel %vm429, %v405, 0.0
    %v467 = vsel %vm429, %v406, 0.0
    %v468 = vadd.f32 %v466, %v467
    %v469 = vrot.slane %v468, 4
    %v470 = vadd.f32 %v468, %v469
    %v471 = vrot.slane %v470, 2
    %v472 = vadd.f32 %v470, %v471
    %v473 = vrot.slane %v472, 1
    %v474 = vadd.f32 %v472, %v473
    %v475 = vsel %vm429, %v407, 0.0
    %v476 = vsel %vm429, %v408, 0.0
    %v477 = vadd.f32 %v475, %v476
    %v478 = vrot.slane %v477, 4
    %v479 = vadd.f32 %v477, %v478
    %v480 = vrot.slane %v479, 2
    %v481 = vadd.f32 %v479, %v480
    %v482 = vrot.slane %v481, 1
    %v483 = vadd.f32 %v481, %v482
    %v484 = vsel %vm429, %v409, 0.0
    %v485 = vsel %vm429, %v410, 0.0
    %v486 = vadd.f32 %v484, %v485
    %v487 = vrot.slane %v486, 4
    %v488 = vadd.f32 %v486, %v487
    %v489 = vrot.slane %v488, 2
    %v490 = vadd.f32 %v488, %v489
    %v491 = vrot.slane %v490, 1
    %v492 = vadd.f32 %v490, %v491
    %v493 = vsel %vm429, %v411, 0.0
    %v494 = vsel %vm429, %v412, 0.0
    %v495 = vadd.f32 %v493, %v494
    %v496 = vrot.slane %v495, 4
    %v497 = vadd.f32 %v495, %v496
    %v498 = vrot.slane %v497, 2
    %v499 = vadd.f32 %v497, %v498
    %v500 = vrot.slane %v499, 1
    %v501 = vadd.f32 %v499, %v500
    %v502 = vsel %vm429, %v413, 0.0
    %v503 = vsel %vm429, %v414, 0.0
    %v504 = vadd.f32 %v502, %v503
    %v505 = vrot.slane %v504, 4
    %v506 = vadd.f32 %v504, %v505
    %v507 = vrot.slane %v506, 2
    %v508 = vadd.f32 %v506, %v507
    %v509 = vrot.slane %v508, 1
    %v510 = vadd.f32 %v508, %v509
    %v511 = vsel %vm429, %v415, 0.0
    %v512 = vsel %vm429, %v416, 0.0
    %v513 = vadd.f32 %v511, %v512
    %v514 = vrot.slane %v513, 4
    %v515 = vadd.f32 %v513, %v514
    %v516 = vrot.slane %v515, 2
    %v517 = vadd.f32 %v515, %v516
    %v518 = vrot.slane %v517, 1
    %v519 = vadd.f32 %v517, %v518
    %v520 = vsel %vm429, %v417, 0.0
    %v521 = vsel %vm429, %v418, 0.0
    %v522 = vadd.f32 %v520, %v521
    %v523 = vrot.slane %v522, 4
    %v524 = vadd.f32 %v522, %v523
    %v525 = vrot.slane %v524, 2
    %v526 = vadd.f32 %v524, %v525
    %v527 = vrot.slane %v526, 1
    %v528 = vadd.f32 %v526, %v527
    %v529 = vsel %vm429, %v419, 0.0
    %v530 = vsel %vm429, %v420, 0.0
    %v531 = vadd.f32 %v529, %v530
    %v532 = vrot.slane %v531, 4
    %v533 = vadd.f32 %v531, %v532
    %v534 = vrot.slane %v533, 2
    %v535 = vadd.f32 %v533, %v534
    %v536 = vrot.slane %v535, 1
    %v537 = vadd.f32 %v535, %v536
    %v538 = vsel %vm429, %v421, 0.0
    %v539 = vsel %vm429, %v422, 0.0
    %v540 = vadd.f32 %v538, %v539
    %v541 = vrot.slane %v540, 4
    %v542 = vadd.f32 %v540, %v541
    %v543 = vrot.slane %v542, 2
    %v544 = vadd.f32 %v542, %v543
    %v545 = vrot.slane %v544, 1
    %v546 = vadd.f32 %v544, %v545
    %v547 = vsel %vm429, %v423, 0.0
    %v548 = vsel %vm429, %v424, 0.0
    %v549 = vadd.f32 %v547, %v548
    %v550 = vrot.slane %v549, 4
    %v551 = vadd.f32 %v549, %v550
    %v552 = vrot.slane %v551, 2
    %v553 = vadd.f32 %v551, %v552
    %v554 = vrot.slane %v553, 1
    %v555 = vadd.f32 %v553, %v554
    %v556 = vsel %vm429, %v425, 0.0
    %v557 = vsel %vm429, %v426, 0.0
    %v558 = vadd.f32 %v556, %v557
    %v559 = vrot.slane %v558, 4
    %v560 = vadd.f32 %v558, %v559
    %v561 = vrot.slane %v560, 2
    %v562 = vadd.f32 %v560, %v561
    %v563 = vrot.slane %v562, 1
    %v564 = vadd.f32 %v562, %v563
    %v565 = vsel %vm429, %v427, 0.0
    %v566 = vsel %vm429, %v428, 0.0
    %v567 = vadd.f32 %v565, %v566
    %v568 = vrot.slane %v567, 4
    %v569 = vadd.f32 %v567, %v568
    %v570 = vrot.slane %v569, 2
    %v571 = vadd.f32 %v569, %v570
    %v572 = vrot.slane %v571, 1
    %v573 = vadd.f32 %v571, %v572
    %v574 = vld [vmem:[%s3] sm:$0xff]
    %v575 = vld [vmem:[%s3 + $0x8] sm:$0xff]
    %v576 = vld [vmem:[%s3 + $0x10] sm:$0xff]
    %v577 = vld [vmem:[%s3 + $0x18] sm:$0xff]
    %v578 = vld [vmem:[%s4] sm:$0x1]
    %v580 = vlaneseq
    %v581 = vshrl.u32 %v580, 7
    %v582 = vsub.s32 0, %v581
    %v583 = vrot.slane %v578, %v582
    %vm601 = vcmask 1041409
    %v602 = vsel %vm601, %v447, %v438
    %vm603 = vcmask 1042434
    %v604 = vsel %vm603, %v456, %v602
    %vm605 = vcmask 1043459
    %v606 = vsel %vm605, %v465, %v604
    %vm607 = vcmask 1044484
    %v608 = vsel %vm607, %v474, %v606
    %vm609 = vcmask 1045509
    %v610 = vsel %vm609, %v483, %v608
    %vm611 = vcmask 1046534
    %v612 = vsel %vm611, %v492, %v610
    %vm613 = vcmask 1047559
    %v614 = vsel %vm613, %v501, %v612
    %v615 = vsel %vm601, %v519, %v510
    %v616 = vsel %vm603, %v528, %v615
    %v617 = vsel %vm605, %v537, %v616
    %v618 = vsel %vm607, %v546, %v617
    %v619 = vsel %vm609, %v555, %v618
    %v620 = vsel %vm611, %v564, %v619
    %v621 = vsel %vm613, %v573, %v620
    %v622 = vsel %vm429, %v614, 0
    %v624 = vsel %vm429, %v621, 0
    %626 = vmatprep.subr.mxu0 0.0
    %627 = vmatpush1.msra.mxu0 0.0
    %628 = vmatprep.subr.mxu0 0.0
    %629 = vmatpush1.msra.mxu0 0.0
    %630 = vmatprep.subr.mxu0 0.0
    %631 = vmatpush1.msra.mxu0 0.0
    %632 = vmatprep.subr.mxu0 0.0
    %633 = vmatpush1.msra.mxu0 0.0
    %634 = vmatprep.subr.mxu0 0.0
    %635 = vmatpush1.msra.mxu0 0.0
    %636 = vmatprep.subr.mxu0 0.0
    %637 = vmatpush1.msra.mxu0 0.0
    %638 = vmatprep.subr.mxu0 0.0
    %639 = vmatpush1.msra.mxu0 0.0
    %640 = vmatprep.subr.mxu0 0.0
    %641 = vmatpush1.msra.mxu0 0.0
    %642 = vmatprep.subr.mxu0 0.0
    %643 = vmatpush1.msra.mxu0 0.0
    %644 = vmatprep.subr.mxu0 0.0
    %645 = vmatpush1.msra.mxu0 0.0
    %646 = vmatprep.subr.mxu0 0.0
    %647 = vmatpush1.msra.mxu0 0.0
    %648 = vmatprep.subr.mxu0 0.0
    %649 = vmatpush1.msra.mxu0 0.0
    %650 = vmatprep.subr.mxu0 0.0
    %651 = vmatpush1.msra.mxu0 %v577
    %652 = vmatprep.subr.mxu0 0.0
    %653 = vmatpush1.msra.mxu0 %v576
    %654 = vmatprep.subr.mxu0 0.0
    %655 = vmatpush1.msra.mxu0 %v575
    %656 = vmatprep.subr.mxu0 0.0
    %657 = vmatpush1.msra.mxu0 %v574
    %658 = vmatprep.subr.mxu0 0.0
    %659 = vmatpush2.msra.mxu0 0.0
    %660 = vmatprep.subr.mxu0 0.0
    %661 = vmatpush2.msra.mxu0 0.0
    %662 = vmatprep.subr.mxu0 0.0
    %663 = vmatpush2.msra.mxu0 0.0
    %664 = vmatprep.subr.mxu0 0.0
    %665 = vmatpush2.msra.mxu0 0.0
    %666 = vmatprep.subr.mxu0 0.0
    %667 = vmatpush2.msra.mxu0 0.0
    %668 = vmatprep.subr.mxu0 0.0
    %669 = vmatpush2.msra.mxu0 0.0
    %670 = vmatprep.subr.mxu0 0.0
    %671 = vmatpush2.msra.mxu0 0.0
    %672 = vmatprep.subr.mxu0 0.0
    %673 = vmatpush2.msra.mxu0 0.0
    %674 = vmatprep.subr.mxu0 0.0
    %675 = vmatpush2.msra.mxu0 0.0
    %676 = vmatprep.subr.mxu0 0.0
    %677 = vmatpush2.msra.mxu0 0.0
    %678 = vmatprep.subr.mxu0 0.0
    %679 = vmatpush2.msra.mxu0 0.0
    %680 = vmatprep.subr.mxu0 0.0
    %681 = vmatpush2.msra.mxu0 0.0
    %682 = vmatprep.subr.mxu0 0.0
    %683 = vmatpush2.msra.mxu0 0.0
    %684 = vmatprep.subr.mxu0 0.0
    %685 = vmatpush2.msra.mxu0 0.0
    %686 = vmatprep.subr.mxu0 0.0
    %687 = vmatpush2.msra.mxu0 0.0
    %688 = vmatprep.subr.mxu0 0.0
    %689 = vmatpush2.msra.mxu0 0.0
    %690 = vmatprep.mubr.f32.mxu0 0.0
    %691 = vmatmul.mubr.f32.gmra.mxu0 %v622
    %v692 = vpop.f32.mrf.mxu0
    %v693 = vadd.f32 %v583, %v692
    %v694 = vpop.f32.mrf.mxu0
    %695 = vmatprep.mubr.f32.mxu0 0.0
    %696 = vmatmul.mubr.f32.gmra.mxu0 %v624
    %v697 = vpop.f32.mrf.mxu0
    %v698 = vadd.f32 %v583, %v697
    %v699 = vpop.f32.mrf.mxu0
    %700 = vdwg.mxu0
    %vm701 = vcmask 15360
    %702 = vst.msk [vmem:[%s5] sm:$0xff] %vm701, %v693
    %703 = vst.msk [vmem:[%s5 + $0x8] sm:$0xff] %vm701, %v698
    // Predicated region
    $region26: #{tpu_custom_call.1} parent=1 // pred_check
      _
    $region27: #{tpu_custom_call.1} parent=1 // pred_check_branch
      %705 = sbr.rel (0) target = $region29
    $region28: #{tpu_custom_call.1} parent=1 // pred_region
      _
    $region29: #{tpu_custom_call.1} parent=1 // pred_fallthru
      _
    // Predicated region
    $region30: #{tpu_custom_call.1} parent=1 // pred_check
      _
    $region31: #{tpu_custom_call.1} parent=1 // pred_check_branch
      %707 = sbr.rel (0) target = $region33
    $region32: #{tpu_custom_call.1} parent=1 // pred_region
      _
    $region33: #{tpu_custom_call.1} parent=1 // pred_fallthru
      _
    %708 = vsyncpa [#allocation3], 1

</llo_original>
